<compile_context>
chip_gen: v7x
topology: tpu7x:2x2x1
jax: 0.10.0
libtpu: 0.0.40
codegen_flags: <defaults>
</compile_context>

<pallas_src>
import functools

import jax
import jax.numpy as jnp
from jax.experimental import pallas as pl
from jax.experimental.pallas import tpu as pltpu


def _layernorm_kernel(x_ref, gamma_ref, beta_ref, o_ref, *, eps, n_elems):
    # x_ref block: (1, C, H*W) — one whole sample resident in VMEM, lane-dense.
    x = x_ref[...].astype(jnp.float32)

    # Single-pass moment computation (f32 accumulation).
    s1 = jnp.sum(x)
    s2 = jnp.sum(x * x)
    mean = s1 / n_elems
    # PyTorch .std() default is unbiased (divide by n-1); eps is added to std.
    var = (s2 - s1 * mean) / (n_elems - 1.0)
    std = jnp.sqrt(var)
    inv = 1.0 / (std + eps)  # exact scalar reciprocal, computed once per sample

    # Fused normalize + affine:  y = (x - mean) * (gamma * inv) + beta  ==  x*a + b
    a = gamma_ref[...].astype(jnp.float32) * inv          # (1, C, 1)
    b = beta_ref[...].astype(jnp.float32) - mean * a      # (1, C, 1)

    o_ref[...] = (x * a + b).astype(o_ref.dtype)


def layer_norm(x, gamma, beta, eps=1e-5):
    """x: (N, C, H, W); gamma, beta: (C,). Returns (N, C, H, W)."""
    N, C, H, W = x.shape
    HW = H * W
    n_elems = C * HW

    # Lane-dense flatten (contiguous, no data movement) + per-channel params as (1, C, 1).
    x3 = x.reshape(N, C, HW)
    gamma3 = gamma.reshape(1, C, 1).astype(jnp.float32)
    beta3 = beta.reshape(1, C, 1).astype(jnp.float32)

    kernel = functools.partial(_layernorm_kernel, eps=eps, n_elems=float(n_elems))

    # TODO(synk): for very large samples (whole-sample f32 tile > ~6-8 MiB on v7x) or
    # tiny N, add a second grid axis over C*H*W with two-phase stats + normalize.
    out3 = pl.pallas_call(
        kernel,
        out_shape=jax.ShapeDtypeStruct((N, C, HW), x.dtype),
        grid_spec=pltpu.PrefetchScalarGridSpec(
            num_scalar_prefetch=0,
            grid=(N,),
            in_specs=[
                pl.BlockSpec((1, C, HW), lambda i: (i, 0, 0)),
                pl.BlockSpec((1, C, 1), lambda i: (0, 0, 0)),
                pl.BlockSpec((1, C, 1), lambda i: (0, 0, 0)),
            ],
            out_specs=pl.BlockSpec((1, C, HW), lambda i: (i, 0, 0)),
        ),
        compiler_params=pltpu.CompilerParams(
            dimension_semantics=("parallel",),
            vmem_limit_bytes=48 * 1024 * 1024,  # safe on v7x (64 MiB) and v5e/v6e (128 MiB)
        ),
    )(x3, gamma3, beta3)

    return out3.reshape(N, C, H, W)


def layer_norm_ref(x, gamma, beta, eps=1e-5):
    """Pure-JAX reference matching the PyTorch module semantics."""
    N = x.shape[0]
    xf = x.reshape(N, -1).astype(jnp.float32)
    mean = xf.mean(axis=1).reshape(N, 1, 1, 1)
    std = xf.std(axis=1, ddof=1).reshape(N, 1, 1, 1)  # unbiased, like torch .std()
    y = (x.astype(jnp.float32) - mean) / (std + eps)
    y = y * gamma.reshape(1, -1, 1, 1) + beta.reshape(1, -1, 1, 1)
    return y.astype(x.dtype)


if __name__ == "__main__":
    key = jax.random.PRNGKey(0)
    kx, kg = jax.random.split(key)

    N, C, H, W = 2, 4, 16, 16
    x = jax.random.normal(kx, (N, C, H, W), dtype=jnp.float32)

    # Deterministic parameter init matching nn.Parameter(torch.Tensor(C).uniform_()) / zeros
    gamma = jax.random.uniform(kg, (C,), dtype=jnp.float32)
    beta = jnp.zeros((C,), dtype=jnp.float32)

    out = layer_norm(x, gamma, beta, eps=1e-5)
    out = jax.block_until_ready(out)

    ref = layer_norm_ref(x, gamma, beta, eps=1e-5)
    assert jnp.allclose(out, ref, atol=1e-4, rtol=1e-4), "mismatch vs reference"

    print("KERNEL_OK")
</pallas_src>

<mosaic_0001>
module attributes {stable_mosaic.version = 11 : i64} {
  func.func @_layernorm_kernel(%arg0: i32, %arg1: memref<1x4x256xf32, #tpu.memory_space<vmem>>, %arg2: memref<1x4x1xf32, #tpu.memory_space<vmem>>, %arg3: memref<1x4x1xf32, #tpu.memory_space<vmem>>, %arg4: memref<1x4x256xf32, #tpu.memory_space<vmem>>) attributes {dimension_semantics = [#tpu.dimension_semantics<parallel>], iteration_bounds = array<i64: 2>, scalar_prefetch = 0 : i64, scratch_operands = 0 : i64, tpu.core_type = #tpu.core_type<tc>, window_params = [{transform_indices = @transform_0, window_bounds = array<i64: 1, 4, 256>}, {pipeline_mode = #tpu.pipeline_mode<synchronous>, transform_indices = @transform_1, window_bounds = array<i64: 1, 4, 1>}, {pipeline_mode = #tpu.pipeline_mode<synchronous>, transform_indices = @transform_2, window_bounds = array<i64: 1, 4, 1>}, {transform_indices = @transform_3, window_bounds = array<i64: 1, 4, 256>}]} {
    %c0 = arith.constant 0 : index
    %c0_0 = arith.constant 0 : index
    %c0_1 = arith.constant 0 : index
    %0 = vector.load %arg1[%c0, %c0_0, %c0_1] : memref<1x4x256xf32, #tpu.memory_space<vmem>>, vector<1x4x256xf32>
    %1 = vector.shape_cast %0 : vector<1x4x256xf32> to vector<1x1x4x256xf32>
    %cst = arith.constant dense<0.000000e+00> : vector<1xf32>
    %2 = vector.multi_reduction <add>, %1, %cst [1, 2, 3] : vector<1x1x4x256xf32> to vector<1xf32>
    %3 = vector.shape_cast %2 : vector<1xf32> to vector<1x1x1x1xf32>
    %4 = vector.extract %3[0, 0, 0, 0] : f32 from vector<1x1x1x1xf32>
    %5 = arith.mulf %0, %0 : vector<1x4x256xf32>
    %6 = vector.shape_cast %5 : vector<1x4x256xf32> to vector<1x1x4x256xf32>
    %cst_2 = arith.constant dense<0.000000e+00> : vector<1xf32>
    %7 = vector.multi_reduction <add>, %6, %cst_2 [1, 2, 3] : vector<1x1x4x256xf32> to vector<1xf32>
    %8 = vector.shape_cast %7 : vector<1xf32> to vector<1x1x1x1xf32>
    %9 = vector.extract %8[0, 0, 0, 0] : f32 from vector<1x1x1x1xf32>
    %cst_3 = arith.constant 1.024000e+03 : f32
    %10 = arith.divf %4, %cst_3 : f32
    %11 = arith.mulf %4, %10 : f32
    %12 = arith.subf %9, %11 : f32
    %cst_4 = arith.constant 1.023000e+03 : f32
    %13 = arith.divf %12, %cst_4 : f32
    %14 = math.sqrt %13 : f32
    %cst_5 = arith.constant 9.99999974E-6 : f32
    %15 = arith.addf %14, %cst_5 : f32
    %cst_6 = arith.constant 1.000000e+00 : f32
    %16 = arith.divf %cst_6, %15 : f32
    %c0_7 = arith.constant 0 : index
    %c0_8 = arith.constant 0 : index
    %c0_9 = arith.constant 0 : index
    %17 = vector.load %arg2[%c0_7, %c0_8, %c0_9] : memref<1x4x1xf32, #tpu.memory_space<vmem>>, vector<1x4x1xf32>
    %18 = vector.broadcast %16 : f32 to vector<1x4x1xf32>
    %19 = arith.mulf %17, %18 : vector<1x4x1xf32>
    %c0_10 = arith.constant 0 : index
    %c0_11 = arith.constant 0 : index
    %c0_12 = arith.constant 0 : index
    %20 = vector.load %arg3[%c0_10, %c0_11, %c0_12] : memref<1x4x1xf32, #tpu.memory_space<vmem>>, vector<1x4x1xf32>
    %21 = vector.broadcast %10 : f32 to vector<1x4x1xf32>
    %22 = arith.mulf %21, %19 : vector<1x4x1xf32>
    %23 = arith.subf %20, %22 : vector<1x4x1xf32>
    %24 = vector.broadcast %19 : vector<1x4x1xf32> to vector<1x4x256xf32>
    %25 = arith.mulf %0, %24 : vector<1x4x256xf32>
    %26 = vector.broadcast %23 : vector<1x4x1xf32> to vector<1x4x256xf32>
    %27 = arith.addf %25, %26 : vector<1x4x256xf32>
    %c0_13 = arith.constant 0 : index
    %c0_14 = arith.constant 0 : index
    %c0_15 = arith.constant 0 : index
    %28 = vector.load %arg4[%c0_13, %c0_14, %c0_15] : memref<1x4x256xf32, #tpu.memory_space<vmem>>, vector<1x4x256xf32>
    tpu.vector_store %arg4[%c0_13, %c0_14, %c0_15], %27 {strides = array<i32>} : memref<1x4x256xf32, #tpu.memory_space<vmem>>, vector<1x4x256xf32>,
    return
  }
  func.func @transform_0(%arg0: i32) -> (i32, i32, i32) {
    %c0_i32 = arith.constant 0 : i32
    %c0_i32_0 = arith.constant 0 : i32
    %c0_i32_1 = arith.constant 0 : i32
    return %arg0, %c0_i32, %c0_i32_0 : i32, i32, i32
  }
  func.func @transform_1(%arg0: i32) -> (i32, i32, i32) {
    %c0_i32 = arith.constant 0 : i32
    %c0_i32_0 = arith.constant 0 : i32
    %c0_i32_1 = arith.constant 0 : i32
    %c0_i32_2 = arith.constant 0 : i32
    return %c0_i32, %c0_i32_0, %c0_i32_1 : i32, i32, i32
  }
  func.func @transform_2(%arg0: i32) -> (i32, i32, i32) {
    %c0_i32 = arith.constant 0 : i32
    %c0_i32_0 = arith.constant 0 : i32
    %c0_i32_1 = arith.constant 0 : i32
    %c0_i32_2 = arith.constant 0 : i32
    return %c0_i32, %c0_i32_0, %c0_i32_1 : i32, i32, i32
  }
  func.func @transform_3(%arg0: i32) -> (i32, i32, i32) {
    %c0_i32 = arith.constant 0 : i32
    %c0_i32_0 = arith.constant 0 : i32
    %c0_i32_1 = arith.constant 0 : i32
    return %arg0, %c0_i32, %c0_i32_0 : i32, i32, i32
  }
}

</mosaic_0001>

<llo_original>
// kernel: tpu_custom_call.1
$region0: #{tpu_custom_call.1}
  #allocation0 [shape = 'u32[]', space=smem, size = 0x4, offset = 0x4, fixed_abs, tag = 'smem constant byte address 0x4 - core index']
  #allocation1 [shape = 'u32[144,128]{1,0:T(1,128)}', space=vmem, size = 0x12000, scoped, tag = 'internal scratch']
  %s0 = inlined_call_operand.hbm [shape: f32[2,4,256], index: 0, kind: input, shape index: {}]
  %s1 = inlined_call_operand.vmem [shape: f32[1,4,1], index: 1, kind: input, shape index: {}]
  %s2 = inlined_call_operand.vmem [shape: f32[1,4,1], index: 2, kind: input, shape index: {}]
  %s3 = inlined_call_operand.hbm [shape: f32[2,4,256], index: 3, kind: output, shape index: {}]
  %s4 = sld [smem:[#allocation0]]
  $region49: #{tpu_custom_call.1} parent=0
    _
  %s6 = ssub.s32 1, %s4
  %s7 = scalar_select 0, %s6, %s4
  $region1: #{tpu_custom_call.1} parent=0
    #allocation2 [shape = 'u8[8192]{0}', space=vmem, size = 0x2000, scoped, tag = 'input window, operand 0']
    #allocation3 [shape = 's32[2]{0}', space=sflag, size = 0x8, scoped, tag = 'scoped memory for tpu_custom_call.1']
    #allocation4 [shape = 's32[2]{0}', space=sflag, size = 0x8, scoped, tag = 'scoped memory for tpu_custom_call.1']
    #allocation5 [shape = 'u8[8192]{0}', space=vmem, size = 0x2000, scoped, tag = 'output window, operand 0']
    %8 = vsyncpa [#allocation3], 0
    %s9 = scalar_lea.sflag [#allocation3], 1
    %10 = vsyncpa %s9, 0
    %11 = vsyncpa [#allocation4], 0
    %s12 = scalar_lea.sflag [#allocation4], 1
    %13 = vsyncpa %s12, 0
    loop: start=0, step=1, limit=4
    $region2: #{tpu_custom_call.1} parent=1 // loop_pre_header
      _
    $region3: #{tpu_custom_call.1} parent=1 // loop_header
      %s15 = sphi 0, %s19
      %p16 = scmp.ge.s32.totalorder %s15, 4
      %s25 = sphi 0, %s27
      %s28 = sphi 0, %s25
      %s29 = sphi 0, %s28
      %s45 = sphi 0, %s29
      %s49 = sphi 0, %s49
      %s51 = sphi 0, %s49
      %s52 = sphi 0, %s51
      %s66 = sphi 0, %s52
      %s70 = sphi 0, %s70
      %s72 = sphi 0, %s70
      %s73 = sphi 0, %s72
      %s87 = sphi 0, %s73
      %s93 = sphi 0, %s95
      %s96 = sphi 0, %s93
      %s97 = sphi 0, %s96
      %s113 = sphi 0, %s97
    $region4: #{tpu_custom_call.1} parent=1 // loop_header_branch
      %18 = sbr.rel (%p16) target = $region8
    $region5: #{tpu_custom_call.1} parent=1 // loop_body
      %s20 = ssub.s32 %s15, 1
      %s21 = ssub.s32 %s15, 2
      %s22 = sadd.s32 %s15, 1
      %s23 = ssub.s32 %s15, %s22
      %p24 = scmp.eq.s32.totalorder %s23, 0
      %s26 = sadd.s32 %s25, 1
      %s27 = scalar_select %p24, %s25, %s26
      %p30 = pneg %p24
      %p31 = scmp.eq.s32.totalorder %s15, 1
      %p32 = por %p30, %p31
      %p33 = scmp.ne.s32.totalorder %s25, %s28
      %p34 = scmp.eq.s32.totalorder %s15, 0
      %p35 = por %p33, %p34
      %p36 = scmp.ne.s32.totalorder %s25, %s28
      %p37 = scmp.eq.s32.totalorder %s20, 1
      %p38 = por %p36, %p37
      %p39 = scmp.ne.s32.totalorder %s28, %s29
      %p40 = scmp.eq.s32.totalorder %s20, 0
      %p41 = por %p39, %p40
      %p42 = scmp.ne.s32.totalorder %s28, %s29
      %p43 = scmp.eq.s32.totalorder %s21, 1
      %p44 = por %p42, %p43
      %p46 = scmp.ne.s32.totalorder %s29, %s45
      %p47 = scmp.eq.s32.totalorder %s21, 0
      %p48 = por %p46, %p47
      %s50 = sadd.s32 %s49, 1
      %p53 = scmp.eq.s32.totalorder %s15, 1
      %p54 = scmp.ne.s32.totalorder %s49, %s51
      %p55 = scmp.eq.s32.totalorder %s15, 0
      %p56 = por %p54, %p55
      %p57 = scmp.ne.s32.totalorder %s49, %s51
      %p58 = scmp.eq.s32.totalorder %s20, 1
      %p59 = por %p57, %p58
      %p60 = scmp.ne.s32.totalorder %s51, %s52
      %p61 = scmp.eq.s32.totalorder %s20, 0
      %p62 = por %p60, %p61
      %p63 = scmp.ne.s32.totalorder %s51, %s52
      %p64 = scmp.eq.s32.totalorder %s21, 1
      %p65 = por %p63, %p64
      %p67 = scmp.ne.s32.totalorder %s52, %s66
      %p68 = scmp.eq.s32.totalorder %s21, 0
      %p69 = por %p67, %p68
      %s71 = sadd.s32 %s70, 1
      %p74 = scmp.eq.s32.totalorder %s15, 1
      %p75 = scmp.ne.s32.totalorder %s70, %s72
      %p76 = scmp.eq.s32.totalorder %s15, 0
      %p77 = por %p75, %p76
      %p78 = scmp.ne.s32.totalorder %s70, %s72
      %p79 = scmp.eq.s32.totalorder %s20, 1
      %p80 = por %p78, %p79
      %p81 = scmp.ne.s32.totalorder %s72, %s73
      %p82 = scmp.eq.s32.totalorder %s20, 0
      %p83 = por %p81, %p82
      %p84 = scmp.ne.s32.totalorder %s72, %s73
      %p85 = scmp.eq.s32.totalorder %s21, 1
      %p86 = por %p84, %p85
      %p88 = scmp.ne.s32.totalorder %s73, %s87
      %p89 = scmp.eq.s32.totalorder %s21, 0
      %p90 = por %p88, %p89
      %s91 = ssub.s32 %s15, %s22
      %p92 = scmp.eq.s32.totalorder %s91, 0
      %s94 = sadd.s32 %s93, 1
      %s95 = scalar_select %p92, %s93, %s94
      %p98 = pneg %p92
      %p99 = scmp.eq.s32.totalorder %s15, 1
      %p100 = por %p98, %p99
      %p101 = scmp.ne.s32.totalorder %s93, %s96
      %p102 = scmp.eq.s32.totalorder %s15, 0
      %p103 = por %p101, %p102
      %p104 = scmp.ne.s32.totalorder %s93, %s96
      %p105 = scmp.eq.s32.totalorder %s20, 1
      %p106 = por %p104, %p105
      %p107 = scmp.ne.s32.totalorder %s96, %s97
      %p108 = scmp.eq.s32.totalorder %s20, 0
      %p109 = por %p107, %p108
      %p110 = scmp.ne.s32.totalorder %s96, %s97
      %p111 = scmp.eq.s32.totalorder %s21, 1
      %p112 = por %p110, %p111
      %p114 = scmp.ne.s32.totalorder %s97, %s113
      %p115 = scmp.eq.s32.totalorder %s21, 0
      %p116 = por %p114, %p115
      %p117 = scmp.le.s32.totalorder 1, %s15
      %p118 = scmp.lt.s32.totalorder %s15, 3
      %p119 = pnand %p117, %p118
      %p120 = pneg %p119
      // Predicated region
      $region9: #{tpu_custom_call.1} parent=5 // pred_check
        _
      $region10: #{tpu_custom_call.1} parent=5 // pred_check_branch
        %122 = sbr.rel (%p119) target = $region12
      $region11: #{tpu_custom_call.1} parent=5 // pred_region
        %s123 = ssub.s32 %s15, 1
        // Predicated region
        $region13: #{tpu_custom_call.1} parent=11 // pred_check
          %p124 = pneg %p62
        $region14: #{tpu_custom_call.1} parent=11 // pred_check_branch
          %126 = sbr.rel (%p124) target = $region16
        $region15: #{tpu_custom_call.1} parent=11 // pred_region
          _
        $region16: #{tpu_custom_call.1} parent=11 // pred_fallthru
          _
        // Predicated region
        $region17: #{tpu_custom_call.1} parent=11 // pred_check
          %p127 = pneg %p83
        $region18: #{tpu_custom_call.1} parent=11 // pred_check_branch
          %129 = sbr.rel (%p127) target = $region20
        $region19: #{tpu_custom_call.1} parent=11 // pred_region
          _
        $region20: #{tpu_custom_call.1} parent=11 // pred_fallthru
          _
      $region12: #{tpu_custom_call.1} parent=5 // pred_fallthru
        _
      %p130 = scmp.lt.s32.totalorder %s15, 2
      // Predicated region
      $region21: #{tpu_custom_call.1} parent=5 // pred_check
        %p131 = pneg %p130
      $region22: #{tpu_custom_call.1} parent=5 // pred_check_branch
        %133 = sbr.rel (%p131) target = $region24
      $region23: #{tpu_custom_call.1} parent=5 // pred_region
        // Predicated region
        $region25: #{tpu_custom_call.1} parent=23 // pred_check
          %p134 = pneg %p35
        $region26: #{tpu_custom_call.1} parent=23 // pred_check_branch
          %136 = sbr.rel (%p134) target = $region28
        $region27: #{tpu_custom_call.1} parent=23 // pred_region
          %s137 = sand.u32 %s25, 1
          %s138 = scalar_lea.sflag [#allocation3], %s137
          %s139 = sand.u32 %s25, 1
          %s140 = smul.addr %s139, 8
          %s141 = scalar_lea.vmem [#allocation2], %s140
          %s143 = ssub.s32 128, 128
          %144 = vsyncadd %s138, %s143
          %s145 = smul.addr %s15, 2
          %s146 = smul.addr %s145, 64
          %s147 = scalar_lea.hbm %s0, %s146
          %s149 = sshll.u32 %s141, 4
          %s150 = int_to_ptr.vmem [resolvable:$true] %s149
          %152 = dma.hbm_to_vmem [thread:$0]  %s147, 128, %s150, %s138
        $region28: #{tpu_custom_call.1} parent=23 // pred_fallthru
          _
      $region24: #{tpu_custom_call.1} parent=5 // pred_fallthru
        _
      %p153 = scmp.le.s32.totalorder 1, %s15
      %p154 = scmp.lt.s32.totalorder %s15, 3
      %p155 = pnand %p153, %p154
      %p156 = pneg %p155
      // Predicated region
      $region29: #{tpu_custom_call.1} parent=5 // pred_check
        _
      $region30: #{tpu_custom_call.1} parent=5 // pred_check_branch
        %158 = sbr.rel (%p155) target = $region32
      $region31: #{tpu_custom_call.1} parent=5 // pred_region
        %s159 = ssub.s32 %s15, 1
        %s160 = sand.u32 %s28, 1
        %s161 = scalar_lea.sflag [#allocation3], %s160
        %s162 = sand.u32 %s28, 1
        %s163 = smul.addr %s162, 8
        %s164 = scalar_lea.vmem [#allocation2], %s163
        // Predicated region
        $region33: #{tpu_custom_call.1} parent=31 // pred_check
          %p165 = pneg %p41
        $region34: #{tpu_custom_call.1} parent=31 // pred_check_branch
          %167 = sbr.rel (%p165) target = $region36
        $region35: #{tpu_custom_call.1} parent=31 // pred_region
          %168 = dma.done %s161, 128
        $region36: #{tpu_custom_call.1} parent=31 // pred_fallthru
          _
        %s169 = sand.u32 %s28, 1
        %s170 = scalar_lea.sflag [#allocation3], %s169
        %s171 = sand.u32 %s28, 1
        %s172 = smul.addr %s171, 8
        %s173 = scalar_lea.vmem [#allocation2], %s172
        %p174 = pneg %p41
        %p175 = pneg %p38
        %p176 = pneg %p62
        %p177 = pneg %p59
        %p178 = pneg %p83
        %p179 = pneg %p80
        %p180 = pneg %p109
        %p181 = pneg %p106
        %s182 = sand.u32 %s96, 1
        %s183 = scalar_lea.sflag [#allocation4], %s182
        %s184 = sand.u32 %s96, 1
        %s185 = smul.addr %s184, 8
        %s186 = scalar_lea.vmem [#allocation5], %s185
        %v187 = vld [vmem:[%s164] sm:$0xff]
        %v189 = vcombine.high %v187, %v187
        %vm191 = vcmask 1043456
        %v192 = vsel %vm191, %v187, 0.0
        %v193 = vsel %vm191, %v189, 0.0
        %v194 = vadd.f32 %v192, %v193
        %195 = vadd.xlane.f32.xlu0 %v194
        %v196 = vpop.xlane.xlu0 %195
        %v197 = vrot.slane %v196, 4
        %v198 = vadd.f32 %v196, %v197
        %v199 = vrot.slane %v198, 2
        %v200 = vadd.f32 %v198, %v199
        %v201 = vrot.slane %v200, 1
        %v202 = vadd.f32 %v200, %v201
        %s203 = vtos %v202
        %v204 = vmul.f32 %v187, %v187
        %v206 = vcombine.high %v204, %v204
        %v208 = vsel %vm191, %v204, 0.0
        %v209 = vsel %vm191, %v206, 0.0
        %v210 = vadd.f32 %v208, %v209
        %211 = vadd.xlane.f32.xlu0 %v210
        %v212 = vpop.xlane.xlu0 %211
        %v213 = vrot.slane %v212, 4
        %v214 = vadd.f32 %v212, %v213
        %v215 = vrot.slane %v214, 2
        %v216 = vadd.f32 %v214, %v215
        %v217 = vrot.slane %v216, 1
        %v218 = vadd.f32 %v216, %v217
        %s219 = vtos %v218
        %v220 = vrcp.pop 1024.0
        %s221 = vtos %v220
        %s222 = smul.f32 %s203, %s221
        %s223 = smul.f32 %s203, %s222
        %s224 = ssub.f32 %s219, %s223
        %v225 = vrcp.pop 1023.0
        %s226 = vtos %v225
        %s227 = smul.f32 %s224, %s226
        %v228 = vstv %s227
        %v229 = vrsqrt.pop %v228
        %v230 = vmul.f32 %v228, %v229
        %vm231 = vcmp.eq.f32.partialorder %v228, inf
        %v232 = vsel %vm231, %v228, %v230
        %vm233 = vcmp.eq.f32.partialorder %v228, 0.0
        %v234 = vand.u32 %v228, 2147483648
        %v235 = vsel %vm233, %v234, %v232
        %s236 = vtos %v235
        %s237 = sadd.f32 %s236, 1e-05
        %v238 = vstv %s237
        %v239 = vrcp.pop %v238
        %s240 = vtos %v239
        %v241 = vld [vmem:[%s1] sm:$0xf]
        %v242 = vstv %s240
        %v243 = vmul.f32 %v241, %v242
        %v244 = vld [vmem:[%s2] sm:$0xf]
        %v245 = vstv %s222
        %v246 = vmul.f32 %v245, %v243
        %v247 = vsub.f32 %v244, %v246
        %249 = vset.pattern.permute.xlu0 0
        %250 = vperm.xlu0 %249, %v243
        %v251 = vpop.permute.xlu0 %250
        %v253 = vunpack.c.l.s4 839922192
        %v254 = vunpack.c.0.s8 %v253
        %v255 = vlaneseq
        %v256 = vshrl.u32 %v255, 7
        %v257 = vsub.s32 %v254, %v256
        %v258 = vrot.slane %v251, %v257
        %v260 = vmul.f32 %v187, %v258
        %262 = vset.pattern.permute.xlu0 0
        %263 = vperm.xlu0 %262, %v247
        %v264 = vpop.permute.xlu0 %263
        %v266 = vunpack.c.l.s4 839922192
        %v267 = vunpack.c.0.s8 %v266
        %v268 = vlaneseq
        %v269 = vshrl.u32 %v268, 7
        %v270 = vsub.s32 %v267, %v269
        %v271 = vrot.slane %v264, %v270
        %v273 = vadd.f32 %v260, %v271
        %274 = vst [vmem:[%s186] sm:$0xff] %v273
        %s275 = sand.u32 %s96, 1
        %s276 = scalar_lea.sflag [#allocation4], %s275
        %s277 = sand.u32 %s96, 1
        %s278 = smul.addr %s277, 8
        %s279 = scalar_lea.vmem [#allocation5], %s278
        // Predicated region
        $region37: #{tpu_custom_call.1} parent=31 // pred_check
          %p280 = pneg %p106
        $region38: #{tpu_custom_call.1} parent=31 // pred_check_branch
          %282 = sbr.rel (%p280) target = $region40
        $region39: #{tpu_custom_call.1} parent=31 // pred_region
          %s284 = ssub.s32 128, 128
          %285 = vsyncadd %s276, %s284
          %s286 = smul.addr %s20, 2
          %s287 = smul.addr %s286, 64
          %s288 = scalar_lea.hbm %s3, %s287
          %s290 = sshll.u32 %s279, 4
          %s291 = int_to_ptr.vmem [resolvable:$true] %s290
          %293 = dma.vmem_to_hbm [thread:$0]  %s291, 128, %s288, %s276
        $region40: #{tpu_custom_call.1} parent=31 // pred_fallthru
          _
      $region32: #{tpu_custom_call.1} parent=5 // pred_fallthru
        _
      %p294 = scmp.le.s32.totalorder 2, %s15
      // Predicated region
      $region41: #{tpu_custom_call.1} parent=5 // pred_check
        %p295 = pneg %p294
      $region42: #{tpu_custom_call.1} parent=5 // pred_check_branch
        %297 = sbr.rel (%p295) target = $region44
      $region43: #{tpu_custom_call.1} parent=5 // pred_region
        %s298 = ssub.s32 %s15, 2
        // Predicated region
        $region45: #{tpu_custom_call.1} parent=43 // pred_check
          %p299 = pneg %p112
        $region46: #{tpu_custom_call.1} parent=43 // pred_check_branch
          %301 = sbr.rel (%p299) target = $region48
        $region47: #{tpu_custom_call.1} parent=43 // pred_region
          %s302 = sand.u32 %s97, 1
          %s303 = scalar_lea.sflag [#allocation4], %s302
          %s304 = sand.u32 %s97, 1
          %s305 = smul.addr %s304, 8
          %s306 = scalar_lea.vmem [#allocation5], %s305
          %307 = dma.done %s303, 128
        $region48: #{tpu_custom_call.1} parent=43 // pred_fallthru
          _
      $region44: #{tpu_custom_call.1} parent=5 // pred_fallthru
        _
    $region6: #{tpu_custom_call.1} parent=1 // loop_footer
      %s19 = sadd.s32 1, %s15
    $region7: #{tpu_custom_call.1} parent=1 // loop_footer_branch
      %14 = sbr.rel target = $region3
    $region8: #{tpu_custom_call.1} parent=1 // loop_exit
      _
    %308 = vsyncpa [#allocation3], 1
    %s309 = scalar_lea.sflag [#allocation3], 1
    %310 = vsyncpa %s309, 1
    %311 = vsyncpa [#allocation4], 1
    %s312 = scalar_lea.sflag [#allocation4], 1
    %313 = vsyncpa %s312, 1

</llo_original>
